<compile_context>
chip_gen: v5e
topology: v5e:2x2
jax: 0.10.0
libtpu: 0.0.40
codegen_flags: <defaults>
</compile_context>

<pallas_src>
import jax
import jax.numpy as jnp
from jax.experimental import pallas as pl
from jax.experimental.pallas import tpu as pltpu

LANE = 128
SUBLANE = 8


def _round_up(n, m):
    return (n + m - 1) // m * m


def _vmem_limit_bytes():
    try:
        return int(pltpu.get_tpu_info().vmem_capacity_bytes) * 3 // 4
    except Exception:
        return 64 * 1024 * 1024  # conservative default (v7x physical = 64 MiB)


def mlp_kernel(x_ref, w1_ref, b1_ref, w2_ref, b2_ref, o_ref):
    # Layer 1: x (TB, in_p) bf16  X  W1 (hid_p, in_p) bf16, contracting axis 1
    # of both operands (== x @ W1^T), f32 accumulation on the MXU.
    h = jax.lax.dot_general(
        x_ref[...], w1_ref[...],
        dimension_numbers=(((1,), (1,)), ((), ())),
        preferred_element_type=jnp.float32)
    h = jnp.maximum(h + b1_ref[...], 0.0)            # f32 bias add + ReLU (VPU)

    # Layer 2: h (TB, hid_p)  X  W2 (out_p, hid_p), contracting axis 1 of both.
    logits = jax.lax.dot_general(
        h.astype(w2_ref.dtype), w2_ref[...],
        dimension_numbers=(((1,), (1,)), ((), ())),
        preferred_element_type=jnp.float32)
    # Padded output lanes already carry a large negative bias (baked into b2 at
    # param-prep time; their matmul contribution is exactly 0), so no in-kernel
    # iota/where mask is needed.
    logits = logits + b2_ref[...]

    # Numerically stable softmax over features; exact divide keeps row sums
    # at 1.0 (denominator is only (TB, 1), so this costs nothing).
    m = jnp.max(logits, axis=1, keepdims=True)
    e = jnp.exp(logits - m)
    denom = jnp.sum(e, axis=1, keepdims=True)
    o_ref[...] = (e / denom).astype(o_ref.dtype)


def prepare_params(w1, b1, w2, b2):
    """Pad feature dims to multiples of 128 and cast MXU operands to bf16.

    Call once and reuse -- this pass is hoisted out of the per-forward path.
    w1: (hidden, input) PyTorch layout; b1: (hidden,); w2: (output, hidden);
    b2: (output,).
    """
    hidden, in_f = w1.shape
    out_f = w2.shape[0]
    in_p = _round_up(in_f, LANE)
    hid_p = _round_up(hidden, LANE)
    out_p = _round_up(out_f, LANE)

    w1_p = jnp.zeros((hid_p, in_p), jnp.bfloat16).at[:hidden, :in_f].set(
        w1.astype(jnp.bfloat16))
    b1_p = jnp.zeros((1, hid_p), jnp.float32).at[0, :hidden].set(
        b1.astype(jnp.float32))
    w2_p = jnp.zeros((out_p, hid_p), jnp.bfloat16).at[:out_f, :hidden].set(
        w2.astype(jnp.bfloat16))
    # Padded output lanes: large finite negative bias. Their matmul contribution
    # is exactly 0 (zero weight rows), so exp(logit - max) underflows to 0 and
    # they never dilute the softmax. No NaN risk (finite value, no inf - inf).
    b2_p = jnp.full((1, out_p), -1e30, jnp.float32).at[0, :out_f].set(
        b2.astype(jnp.float32))
    return w1_p, b1_p, w2_p, b2_p, (in_f, hidden, out_f)


def two_layer_perceptron(x, params, *, batch_tile=1024):
    """x: (B, input_size). Returns (B, output_size) softmax probs in f32."""
    w1_p, b1_p, w2_p, b2_p, (in_f, hidden, out_f) = params
    B = x.shape[0]
    hid_p, in_p = w1_p.shape
    out_p = w2_p.shape[0]

    vmem_limit = _vmem_limit_bytes()

    # ---- batch-tile selection ------------------------------------------------
    # Resident (single-buffered) weights + biases.
    weight_bytes = 2 * (hid_p * in_p + out_p * hid_p) + 4 * (hid_p + out_p)
    # Per batch-row on-chip bytes: x tile (bf16, double-buffered), hidden
    # activation (f32 + bf16 copy), output tile (f32, double-buffered).
    per_row_bytes = 4 * in_p + 6 * hid_p + 8 * out_p
    budget = max((vmem_limit - weight_bytes) * 3 // 4, 2 * 1024 * 1024)
    tb_cap = max(SUBLANE, budget // per_row_bytes // SUBLANE * SUBLANE)

    tb = max(SUBLANE, min(batch_tile, _round_up(B, SUBLANE), tb_cap))
    # Keep >= 2 grid steps whenever the batch allows it, so
    # dimension_semantics=("parallel",) can shard across v7x's two TensorCores.
    if _round_up(B, tb) == tb and B > SUBLANE:
        tb = _round_up((B + 1) // 2, SUBLANE)
    # Large tiles: round down to a multiple of 256 for full MXU M-utilization.
    if tb >= 512:
        tb = tb // 256 * 256
    b_p = _round_up(B, tb)
    grid = (b_p // tb,)
    # TODO(synk): for models where the bf16 weights alone exceed ~half of VMEM,
    # switch to a reduction grid axis over in_p/hid_p with an f32 accumulator
    # instead of keeping W1/W2 fully resident.

    # ---- input staging (skip the extra pad/copy when not needed) -------------
    if b_p == B and in_p == in_f:
        x_p = x if x.dtype == jnp.bfloat16 else x.astype(jnp.bfloat16)
    else:
        x_p = jnp.zeros((b_p, in_p), jnp.bfloat16).at[:B, :in_f].set(
            x.astype(jnp.bfloat16))

    cost = pl.CostEstimate(
        flops=2 * b_p * (in_p * hid_p + hid_p * out_p),
        transcendentals=b_p * out_p,
        bytes_accessed=(2 * b_p * in_p + 2 * hid_p * in_p + 2 * out_p * hid_p
                        + 4 * (hid_p + out_p) + 4 * b_p * out_p),
    )

    def build(single_buffer_weights):
        # Constant-index operands: single-buffered (double-buffering them is
        # pure VMEM waste since their index_map never changes).
        res = {"pipeline_mode": pl.Buffered(1)} if single_buffer_weights else {}
        return pl.pallas_call(
            mlp_kernel,
            out_shape=jax.ShapeDtypeStruct((b_p, out_p), jnp.float32),
            grid=grid,
            in_specs=[
                pl.BlockSpec((tb, in_p), lambda i: (i, 0)),             # x streamed
                pl.BlockSpec((hid_p, in_p), lambda i: (0, 0), **res),   # W1 resident
                pl.BlockSpec((1, hid_p), lambda i: (0, 0), **res),      # b1 resident
                pl.BlockSpec((out_p, hid_p), lambda i: (0, 0), **res),  # W2 resident
                pl.BlockSpec((1, out_p), lambda i: (0, 0), **res),      # b2 resident
            ],
            out_specs=pl.BlockSpec((tb, out_p), lambda i: (i, 0)),
            compiler_params=pltpu.CompilerParams(
                dimension_semantics=("parallel",),
                vmem_limit_bytes=int(vmem_limit),
            ),
            cost_estimate=cost,
        )

    try:
        out_padded = build(True)(x_p, w1_p, b1_p, w2_p, b2_p)
    except Exception:
        # Fallback if this JAX/Pallas build rejects single-buffered BlockSpecs.
        out_padded = build(False)(x_p, w1_p, b1_p, w2_p, b2_p)

    return out_padded[:B, :out_f]


def _reference(x, w1, b1, w2, b2):
    h = jnp.maximum(x @ w1.T + b1, 0.0)
    return jax.nn.softmax(h @ w2.T + b2, axis=1)


if __name__ == "__main__":
    batch, input_size, hidden_size, output_size = 8, 32, 64, 16

    key = jax.random.PRNGKey(0)
    kx, kw1, kb1, kw2, kb2 = jax.random.split(key, 5)

    # nn.Linear-style uniform(-1/sqrt(fan_in), 1/sqrt(fan_in)) init.
    bound1 = 1.0 / (input_size ** 0.5)
    bound2 = 1.0 / (hidden_size ** 0.5)
    w1 = jax.random.uniform(kw1, (hidden_size, input_size), jnp.float32, -bound1, bound1)
    b1 = jax.random.uniform(kb1, (hidden_size,), jnp.float32, -bound1, bound1)
    w2 = jax.random.uniform(kw2, (output_size, hidden_size), jnp.float32, -bound2, bound2)
    b2 = jax.random.uniform(kb2, (output_size,), jnp.float32, -bound2, bound2)

    params = prepare_params(w1, b1, w2, b2)  # pad + bf16 cast, done once

    x = jax.random.normal(kx, (batch, input_size), dtype=jnp.float32)
    out = jax.block_until_ready(two_layer_perceptron(x, params))

    ref = _reference(x, w1, b1, w2, b2)
    assert out.shape == (batch, output_size)
    assert jnp.allclose(out, ref, atol=2e-2, rtol=2e-2)        # bf16 MXU operands
    assert jnp.allclose(jnp.sum(out, axis=1), 1.0, atol=1e-3)  # exact normalization

    # Second case: ragged batch -> padded rows + a multi-step ("parallel") grid.
    x2 = jax.random.normal(jax.random.PRNGKey(1), (50, input_size), jnp.float32)
    out2 = jax.block_until_ready(two_layer_perceptron(x2, params))
    ref2 = _reference(x2, w1, b1, w2, b2)
    assert out2.shape == (50, output_size)
    assert jnp.allclose(out2, ref2, atol=2e-2, rtol=2e-2)
    assert jnp.allclose(jnp.sum(out2, axis=1), 1.0, atol=1e-3)

    print("KERNEL_OK")
</pallas_src>

<mosaic_0001>
module attributes {stable_mosaic.version = 11 : i64} {
  func.func @mlp_kernel(%arg0: i32, %arg1: memref<8x128xbf16, #tpu.memory_space<vmem>>, %arg2: memref<128x128xbf16, #tpu.memory_space<vmem>>, %arg3: memref<1x128xf32, #tpu.memory_space<vmem>>, %arg4: memref<128x128xbf16, #tpu.memory_space<vmem>>, %arg5: memref<1x128xf32, #tpu.memory_space<vmem>>, %arg6: memref<8x128xf32, #tpu.memory_space<vmem>>) attributes {dimension_semantics = [#tpu.dimension_semantics<parallel>], iteration_bounds = array<i64: 1>, scalar_prefetch = 0 : i64, scratch_operands = 0 : i64, tpu.core_type = #tpu.core_type<tc>, window_params = [{transform_indices = @transform_0, window_bounds = array<i64: 8, 128>}, {pipeline_mode = #tpu.pipeline_mode<synchronous>, transform_indices = @transform_1, window_bounds = array<i64: 128, 128>}, {pipeline_mode = #tpu.pipeline_mode<synchronous>, transform_indices = @transform_2, window_bounds = array<i64: 1, 128>}, {pipeline_mode = #tpu.pipeline_mode<synchronous>, transform_indices = @transform_3, window_bounds = array<i64: 128, 128>}, {pipeline_mode = #tpu.pipeline_mode<synchronous>, transform_indices = @transform_4, window_bounds = array<i64: 1, 128>}, {transform_indices = @transform_5, window_bounds = array<i64: 8, 128>}]} {
    %c0 = arith.constant 0 : index
    %c0_0 = arith.constant 0 : index
    %0 = vector.load %arg1[%c0, %c0_0] : memref<8x128xbf16, #tpu.memory_space<vmem>>, vector<8x128xbf16>
    %c0_1 = arith.constant 0 : index
    %c0_2 = arith.constant 0 : index
    %1 = vector.load %arg2[%c0_1, %c0_2] : memref<128x128xbf16, #tpu.memory_space<vmem>>, vector<128x128xbf16>
    %cst = arith.constant dense<0.000000e+00> : vector<8x128xf32>
    %2 = tpu.matmul %0, %1, %cst {dimension_numbers = #tpu.dot_dimension_numbers<[1], [1], [0], [0], [0, 0, 1, 0], [], []>} : vector<8x128xbf16>, vector<128x128xbf16>, vector<8x128xf32> -> vector<8x128xf32>
    %c0_3 = arith.constant 0 : index
    %c0_4 = arith.constant 0 : index
    %3 = vector.load %arg3[%c0_3, %c0_4] : memref<1x128xf32, #tpu.memory_space<vmem>>, vector<1x128xf32>
    %4 = vector.broadcast %3 : vector<1x128xf32> to vector<8x128xf32>
    %5 = arith.addf %2, %4 : vector<8x128xf32>
    %cst_5 = arith.constant 0.000000e+00 : f32
    %6 = vector.broadcast %cst_5 : f32 to vector<8x128xf32>
    %7 = arith.maximumf %5, %6 : vector<8x128xf32>
    %8 = arith.truncf %7 : vector<8x128xf32> to vector<8x128xbf16>
    %c0_6 = arith.constant 0 : index
    %c0_7 = arith.constant 0 : index
    %9 = vector.load %arg4[%c0_6, %c0_7] : memref<128x128xbf16, #tpu.memory_space<vmem>>, vector<128x128xbf16>
    %cst_8 = arith.constant dense<0.000000e+00> : vector<8x128xf32>
    %10 = tpu.matmul %8, %9, %cst_8 {dimension_numbers = #tpu.dot_dimension_numbers<[1], [1], [0], [0], [0, 0, 1, 0], [], []>} : vector<8x128xbf16>, vector<128x128xbf16>, vector<8x128xf32> -> vector<8x128xf32>
    %c0_9 = arith.constant 0 : index
    %c0_10 = arith.constant 0 : index
    %11 = vector.load %arg5[%c0_9, %c0_10] : memref<1x128xf32, #tpu.memory_space<vmem>>, vector<1x128xf32>
    %12 = vector.broadcast %11 : vector<1x128xf32> to vector<8x128xf32>
    %13 = arith.addf %10, %12 : vector<8x128xf32>
    %cst_11 = arith.constant dense<0xFF800000> : vector<8xf32>
    %14 = vector.multi_reduction <maximumf>, %13, %cst_11 [1] : vector<8x128xf32> to vector<8xf32>
    %15 = vector.shape_cast %14 : vector<8xf32> to vector<8x1xf32>
    %16 = vector.broadcast %15 : vector<8x1xf32> to vector<8x128xf32>
    %17 = arith.subf %13, %16 : vector<8x128xf32>
    %18 = math.exp %17 : vector<8x128xf32>
    %cst_12 = arith.constant dense<0.000000e+00> : vector<8xf32>
    %19 = vector.multi_reduction <add>, %18, %cst_12 [1] : vector<8x128xf32> to vector<8xf32>
    %20 = vector.shape_cast %19 : vector<8xf32> to vector<8x1xf32>
    %21 = vector.broadcast %20 : vector<8x1xf32> to vector<8x128xf32>
    %22 = arith.divf %18, %21 : vector<8x128xf32>
    %c0_13 = arith.constant 0 : index
    %c0_14 = arith.constant 0 : index
    %23 = vector.load %arg6[%c0_13, %c0_14] : memref<8x128xf32, #tpu.memory_space<vmem>>, vector<8x128xf32>
    tpu.vector_store %arg6[%c0_13, %c0_14], %22 {strides = array<i32>} : memref<8x128xf32, #tpu.memory_space<vmem>>, vector<8x128xf32>,
    return
  }
  func.func @transform_0(%arg0: i32) -> (i32, i32) {
    %c0_i32 = arith.constant 0 : i32
    %c0_i32_0 = arith.constant 0 : i32
    return %arg0, %c0_i32 : i32, i32
  }
  func.func @transform_1(%arg0: i32) -> (i32, i32) {
    %c0_i32 = arith.constant 0 : i32
    %c0_i32_0 = arith.constant 0 : i32
    %c0_i32_1 = arith.constant 0 : i32
    return %c0_i32, %c0_i32_0 : i32, i32
  }
  func.func @transform_2(%arg0: i32) -> (i32, i32) {
    %c0_i32 = arith.constant 0 : i32
    %c0_i32_0 = arith.constant 0 : i32
    %c0_i32_1 = arith.constant 0 : i32
    return %c0_i32, %c0_i32_0 : i32, i32
  }
  func.func @transform_3(%arg0: i32) -> (i32, i32) {
    %c0_i32 = arith.constant 0 : i32
    %c0_i32_0 = arith.constant 0 : i32
    %c0_i32_1 = arith.constant 0 : i32
    return %c0_i32, %c0_i32_0 : i32, i32
  }
  func.func @transform_4(%arg0: i32) -> (i32, i32) {
    %c0_i32 = arith.constant 0 : i32
    %c0_i32_0 = arith.constant 0 : i32
    %c0_i32_1 = arith.constant 0 : i32
    return %c0_i32, %c0_i32_0 : i32, i32
  }
  func.func @transform_5(%arg0: i32) -> (i32, i32) {
    %c0_i32 = arith.constant 0 : i32
    %c0_i32_0 = arith.constant 0 : i32
    return %arg0, %c0_i32 : i32, i32
  }
}

module attributes {stable_mosaic.version = 11 : i64} {
  func.func @mlp_kernel(%arg0: i32, %arg1: memref<8x128xbf16, #tpu.memory_space<vmem>>, %arg2: memref<128x128xbf16, #tpu.memory_space<vmem>>, %arg3: memref<1x128xf32, #tpu.memory_space<vmem>>, %arg4: memref<128x128xbf16, #tpu.memory_space<vmem>>, %arg5: memref<1x128xf32, #tpu.memory_space<vmem>>, %arg6: memref<8x128xf32, #tpu.memory_space<vmem>>) attributes {dimension_semantics = [#tpu.dimension_semantics<parallel>], iteration_bounds = array<i64: 1>, scalar_prefetch = 0 : i64, scratch_operands = 0 : i64, tpu.core_type = #tpu.core_type<tc>, window_params = [{transform_indices = @transform_0, window_bounds = array<i64: 8, 128>}, {pipeline_mode = #tpu.pipeline_mode<synchronous>, transform_indices = @transform_1, window_bounds = array<i64: 128, 128>}, {pipeline_mode = #tpu.pipeline_mode<synchronous>, transform_indices = @transform_2, window_bounds = array<i64: 1, 128>}, {pipeline_mode = #tpu.pipeline_mode<synchronous>, transform_indices = @transform_3, window_bounds = array<i64: 128, 128>}, {pipeline_mode = #tpu.pipeline_mode<synchronous>, transform_indices = @transform_4, window_bounds = array<i64: 1, 128>}, {transform_indices = @transform_5, window_bounds = array<i64: 8, 128>}]} {
    %c0 = arith.constant 0 : index
    %c0_0 = arith.constant 0 : index
    %0 = vector.load %arg1[%c0, %c0_0] : memref<8x128xbf16, #tpu.memory_space<vmem>>, vector<8x128xbf16>
    %c0_1 = arith.constant 0 : index
    %c0_2 = arith.constant 0 : index
    %1 = vector.load %arg2[%c0_1, %c0_2] : memref<128x128xbf16, #tpu.memory_space<vmem>>, vector<128x128xbf16>
    %cst = arith.constant dense<0.000000e+00> : vector<8x128xf32>
    %2 = tpu.matmul %0, %1, %cst {dimension_numbers = #tpu.dot_dimension_numbers<[1], [1], [0], [0], [0, 0, 1, 0], [], []>} : vector<8x128xbf16>, vector<128x128xbf16>, vector<8x128xf32> -> vector<8x128xf32>
    %c0_3 = arith.constant 0 : index
    %c0_4 = arith.constant 0 : index
    %3 = vector.load %arg3[%c0_3, %c0_4] : memref<1x128xf32, #tpu.memory_space<vmem>>, vector<1x128xf32>
    %4 = vector.broadcast %3 : vector<1x128xf32> to vector<8x128xf32>
    %5 = arith.addf %2, %4 : vector<8x128xf32>
    %cst_5 = arith.constant 0.000000e+00 : f32
    %6 = vector.broadcast %cst_5 : f32 to vector<8x128xf32>
    %7 = arith.maximumf %5, %6 : vector<8x128xf32>
    %8 = arith.truncf %7 : vector<8x128xf32> to vector<8x128xbf16>
    %c0_6 = arith.constant 0 : index
    %c0_7 = arith.constant 0 : index
    %9 = vector.load %arg4[%c0_6, %c0_7] : memref<128x128xbf16, #tpu.memory_space<vmem>>, vector<128x128xbf16>
    %cst_8 = arith.constant dense<0.000000e+00> : vector<8x128xf32>
    %10 = tpu.matmul %8, %9, %cst_8 {dimension_numbers = #tpu.dot_dimension_numbers<[1], [1], [0], [0], [0, 0, 1, 0], [], []>} : vector<8x128xbf16>, vector<128x128xbf16>, vector<8x128xf32> -> vector<8x128xf32>
    %c0_9 = arith.constant 0 : index
    %c0_10 = arith.constant 0 : index
    %11 = vector.load %arg5[%c0_9, %c0_10] : memref<1x128xf32, #tpu.memory_space<vmem>>, vector<1x128xf32>
    %12 = vector.broadcast %11 : vector<1x128xf32> to vector<8x128xf32>
    %13 = arith.addf %10, %12 : vector<8x128xf32>
    %cst_11 = arith.constant dense<0xFF800000> : vector<8xf32>
    %14 = vector.multi_reduction <maximumf>, %13, %cst_11 [1] : vector<8x128xf32> to vector<8xf32>
    %15 = vector.shape_cast %14 : vector<8xf32> to vector<8x1xf32>
    %16 = vector.broadcast %15 : vector<8x1xf32> to vector<8x128xf32>
    %17 = arith.subf %13, %16 : vector<8x128xf32>
    %18 = math.exp %17 : vector<8x128xf32>
    %cst_12 = arith.constant dense<0.000000e+00> : vector<8xf32>
    %19 = vector.multi_reduction <add>, %18, %cst_12 [1] : vector<8x128xf32> to vector<8xf32>
    %20 = vector.shape_cast %19 : vector<8xf32> to vector<8x1xf32>
    %21 = vector.broadcast %20 : vector<8x1xf32> to vector<8x128xf32>
    %22 = arith.divf %18, %21 : vector<8x128xf32>
    %c0_13 = arith.constant 0 : index
    %c0_14 = arith.constant 0 : index
    %23 = vector.load %arg6[%c0_13, %c0_14] : memref<8x128xf32, #tpu.memory_space<vmem>>, vector<8x128xf32>
    tpu.vector_store %arg6[%c0_13, %c0_14], %22 {strides = array<i32>} : memref<8x128xf32, #tpu.memory_space<vmem>>, vector<8x128xf32>,
    return
  }
  func.func @transform_0(%arg0: i32) -> (i32, i32) {
    %c0_i32 = arith.constant 0 : i32
    %c0_i32_0 = arith.constant 0 : i32
    return %arg0, %c0_i32 : i32, i32
  }
  func.func @transform_1(%arg0: i32) -> (i32, i32) {
    %c0_i32 = arith.constant 0 : i32
    %c0_i32_0 = arith.constant 0 : i32
    %c0_i32_1 = arith.constant 0 : i32
    return %c0_i32, %c0_i32_0 : i32, i32
  }
  func.func @transform_2(%arg0: i32) -> (i32, i32) {
    %c0_i32 = arith.constant 0 : i32
    %c0_i32_0 = arith.constant 0 : i32
    %c0_i32_1 = arith.constant 0 : i32
    return %c0_i32, %c0_i32_0 : i32, i32
  }
  func.func @transform_3(%arg0: i32) -> (i32, i32) {
    %c0_i32 = arith.constant 0 : i32
    %c0_i32_0 = arith.constant 0 : i32
    %c0_i32_1 = arith.constant 0 : i32
    return %c0_i32, %c0_i32_0 : i32, i32
  }
  func.func @transform_4(%arg0: i32) -> (i32, i32) {
    %c0_i32 = arith.constant 0 : i32
    %c0_i32_0 = arith.constant 0 : i32
    %c0_i32_1 = arith.constant 0 : i32
    return %c0_i32, %c0_i32_0 : i32, i32
  }
  func.func @transform_5(%arg0: i32) -> (i32, i32) {
    %c0_i32 = arith.constant 0 : i32
    %c0_i32_0 = arith.constant 0 : i32
    return %arg0, %c0_i32 : i32, i32
  }
}

</mosaic_0001>

<llo_original>
// kernel: tpu_custom_call.1
$region0: #{tpu_custom_call.1}
  #allocation0 [shape = 'u32[]', space=smem, size = 0x4, offset = 0x4, fixed_abs, tag = 'smem constant byte address 0x4 - core index']
  #allocation1 [shape = 'u32[72,128]{1,0:T(1,128)}', space=vmem, size = 0x9000, scoped, tag = 'internal scratch']
  %s0 = inlined_call_operand.hbm [shape: bf16[8,128], index: 0, kind: input, shape index: {}]
  %s1 = inlined_call_operand.hbm [shape: bf16[128,128], index: 1, kind: input, shape index: {}]
  %s2 = inlined_call_operand.vmem [shape: f32[1,128], index: 2, kind: input, shape index: {}]
  %s3 = inlined_call_operand.hbm [shape: bf16[128,128], index: 3, kind: input, shape index: {}]
  %s4 = inlined_call_operand.vmem [shape: f32[1,128], index: 4, kind: input, shape index: {}]
  %s5 = inlined_call_operand.hbm [shape: f32[8,128], index: 5, kind: output, shape index: {}]
  %s6 = sld [smem:[#allocation0]]
  $region42: #{tpu_custom_call.1} parent=0
    _
  %s8 = ssub.s32 1, %s6
  %s9 = scalar_select 0, %s8, %s6
  $region1: #{tpu_custom_call.1} parent=0
    #allocation2 [shape = 'u8[2048]{0}', space=vmem, size = 0x800, scoped, tag = 'input window, operand 0, single buffered']
    #allocation3 [shape = 's32[1]{0}', space=sflag, size = 0x4, scoped, tag = 'scoped memory for tpu_custom_call.1']
    #allocation4 [shape = 's32[1]{0}', space=sflag, size = 0x4, scoped, tag = 'scoped memory for tpu_custom_call.1']
    #allocation5 [shape = 'u8[32768]{0}', space=vmem, size = 0x8000, scoped, tag = 'input window, operand 1, single buffered']
    #allocation6 [shape = 's32[1]{0}', space=sflag, size = 0x4, scoped, tag = 'scoped memory for tpu_custom_call.1']
    #allocation7 [shape = 'u8[32768]{0}', space=vmem, size = 0x8000, scoped, tag = 'input window, operand 3, single buffered']
    #allocation8 [shape = 'u8[4096]{0}', space=vmem, size = 0x1000, scoped, tag = 'output window, operand 0, single buffered']
    %10 = vsyncpa [#allocation3], 0
    %11 = vsyncpa [#allocation6], 0
    %12 = vsyncpa [#allocation4], 0
    // Predicated region
    $region2: #{tpu_custom_call.1} parent=1 // pred_check
      _
    $region3: #{tpu_custom_call.1} parent=1 // pred_check_branch
      %14 = sbr.rel (0) target = $region5
    $region4: #{tpu_custom_call.1} parent=1 // pred_region
      %16 = vsyncadd [#allocation3], 0
      %s18 = sshll.u32 %s0, 4
      %s19 = int_to_ptr.hbm [resolvable:$true] %s18
      %s20 = sshll.u32 [#allocation2], 4
      %s21 = int_to_ptr.vmem [resolvable:$true] %s20
      %23 = dma.hbm_to_vmem [thread:$0]  %s19, 64, %s21, [#allocation3]
    $region5: #{tpu_custom_call.1} parent=1 // pred_fallthru
      _
    // Predicated region
    $region6: #{tpu_custom_call.1} parent=1 // pred_check
      _
    $region7: #{tpu_custom_call.1} parent=1 // pred_check_branch
      %25 = sbr.rel (0) target = $region9
    $region8: #{tpu_custom_call.1} parent=1 // pred_region
      %27 = vsyncadd [#allocation6], 0
      %s28 = sshll.u32 %s1, 4
      %s29 = int_to_ptr.hbm [resolvable:$true] %s28
      %s30 = sshll.u32 [#allocation5], 4
      %s31 = int_to_ptr.vmem [resolvable:$true] %s30
      %36 = dma.hbm_to_vmem [thread:$0]  %s29, 1024, %s31, [#allocation6], 64, 64, 4
    $region9: #{tpu_custom_call.1} parent=1 // pred_fallthru
      _
    // Predicated region
    $region10: #{tpu_custom_call.1} parent=1 // pred_check
      _
    $region11: #{tpu_custom_call.1} parent=1 // pred_check_branch
      %38 = sbr.rel (0) target = $region13
    $region12: #{tpu_custom_call.1} parent=1 // pred_region
      _
    $region13: #{tpu_custom_call.1} parent=1 // pred_fallthru
      _
    // Predicated region
    $region14: #{tpu_custom_call.1} parent=1 // pred_check
      _
    $region15: #{tpu_custom_call.1} parent=1 // pred_check_branch
      %40 = sbr.rel (0) target = $region17
    $region16: #{tpu_custom_call.1} parent=1 // pred_region
      %42 = vsyncadd [#allocation6], 0
      %s43 = sshll.u32 %s3, 4
      %s44 = int_to_ptr.hbm [resolvable:$true] %s43
      %s45 = sshll.u32 [#allocation7], 4
      %s46 = int_to_ptr.vmem [resolvable:$true] %s45
      %51 = dma.hbm_to_vmem [thread:$0]  %s44, 1024, %s46, [#allocation6], 64, 64, 4
    $region17: #{tpu_custom_call.1} parent=1 // pred_fallthru
      _
    // Predicated region
    $region18: #{tpu_custom_call.1} parent=1 // pred_check
      _
    $region19: #{tpu_custom_call.1} parent=1 // pred_check_branch
      %53 = sbr.rel (0) target = $region21
    $region20: #{tpu_custom_call.1} parent=1 // pred_region
      _
    $region21: #{tpu_custom_call.1} parent=1 // pred_fallthru
      _
    // Predicated region
    $region22: #{tpu_custom_call.1} parent=1 // pred_check
      _
    $region23: #{tpu_custom_call.1} parent=1 // pred_check_branch
      %55 = sbr.rel (0) target = $region25
    $region24: #{tpu_custom_call.1} parent=1 // pred_region
      %57 = dma.done [#allocation3], 64
    $region25: #{tpu_custom_call.1} parent=1 // pred_fallthru
      _
    // Predicated region
    $region26: #{tpu_custom_call.1} parent=1 // pred_check
      _
    $region27: #{tpu_custom_call.1} parent=1 // pred_check_branch
      %59 = sbr.rel (0) target = $region29
    $region28: #{tpu_custom_call.1} parent=1 // pred_region
      %61 = dma.done [#allocation6], 1024
    $region29: #{tpu_custom_call.1} parent=1 // pred_fallthru
      _
    // Predicated region
    $region30: #{tpu_custom_call.1} parent=1 // pred_check
      _
    $region31: #{tpu_custom_call.1} parent=1 // pred_check_branch
      %63 = sbr.rel (0) target = $region33
    $region32: #{tpu_custom_call.1} parent=1 // pred_region
      %65 = dma.done [#allocation6], 1024
    $region33: #{tpu_custom_call.1} parent=1 // pred_fallthru
      _
    %v66 = vld [vmem:[#allocation2] sm:$0xf]
    %v67 = vld [vmem:[#allocation5] sm:$0xf]
    %v68 = vld [vmem:[#allocation5 + $0x4] sm:$0xf]
    %v69 = vld [vmem:[#allocation5 + $0x8] sm:$0xf]
    %v70 = vld [vmem:[#allocation5 + $0xc] sm:$0xf]
    %v71 = vld [vmem:[#allocation5 + $0x10] sm:$0xf]
    %v72 = vld [vmem:[#allocation5 + $0x14] sm:$0xf]
    %v73 = vld [vmem:[#allocation5 + $0x18] sm:$0xf]
    %v74 = vld [vmem:[#allocation5 + $0x1c] sm:$0xf]
    %v75 = vld [vmem:[#allocation5 + $0x20] sm:$0xf]
    %v76 = vld [vmem:[#allocation5 + $0x24] sm:$0xf]
    %v77 = vld [vmem:[#allocation5 + $0x28] sm:$0xf]
    %v78 = vld [vmem:[#allocation5 + $0x2c] sm:$0xf]
    %v79 = vld [vmem:[#allocation5 + $0x30] sm:$0xf]
    %v80 = vld [vmem:[#allocation5 + $0x34] sm:$0xf]
    %v81 = vld [vmem:[#allocation5 + $0x38] sm:$0xf]
    %v82 = vld [vmem:[#allocation5 + $0x3c] sm:$0xf]
    %v83 = vld [vmem:[%s2] sm:$0x1]
    %v85 = vperm.slane %v83, 0
    %v103 = vunpack.c.l.b16 %v67
    %v104 = vunpack.c.l.b16 %v68
    %v105 = vunpack.c.l.b16 %v69
    %v106 = vunpack.c.l.b16 %v70
    %v107 = vunpack.c.l.b16 %v71
    %v108 = vunpack.c.l.b16 %v72
    %v109 = vunpack.c.l.b16 %v73
    %v110 = vunpack.c.l.b16 %v74
    %v111 = vunpack.c.l.b16 %v75
    %v112 = vunpack.c.l.b16 %v76
    %v113 = vunpack.c.l.b16 %v77
    %v114 = vunpack.c.l.b16 %v78
    %v115 = vunpack.c.l.b16 %v79
    %v116 = vunpack.c.l.b16 %v80
    %v117 = vunpack.c.l.b16 %v81
    %v118 = vunpack.c.l.b16 %v82
    %v119 = vpack.c.b16 %v104, %v103
    %v120 = vpack.c.b16 %v106, %v105
    %v121 = vpack.c.b16 %v108, %v107
    %v122 = vpack.c.b16 %v110, %v109
    %v123 = vpack.c.b16 %v112, %v111
    %v124 = vpack.c.b16 %v114, %v113
    %v125 = vpack.c.b16 %v116, %v115
    %v126 = vpack.c.b16 %v118, %v117
    %135 = vmatpush.bf16.xpose.msra.mxu0 %v126
    %136 = vmatpush.bf16.xpose.msra.mxu0 %v125
    %137 = vmatpush.bf16.xpose.msra.mxu0 %v124
    %138 = vmatpush.bf16.xpose.msra.mxu0 %v123
    %139 = vmatpush.bf16.xpose.msra.mxu0 %v122
    %140 = vmatpush.bf16.xpose.msra.mxu0 %v121
    %141 = vmatpush.bf16.xpose.msra.mxu0 %v120
    %142 = vmatpush.bf16.xpose.msra.mxu0 %v119
    %143 = vmatmul.bf16.gmra.mxu0 %v66
    %v144 = vpop.f32.mrf.mxu0
    %v145 = vadd.f32 %v85, %v144
    %v146 = vpop.f32.mrf.mxu0
    %147 = vdwg.mxu0
    %v148 = vmax.f32 %v145, 0.0
    %v149 = vpack.c.bf16 %v148, %v148
    %v150 = vld [vmem:[#allocation7] sm:$0xf]
    %v151 = vld [vmem:[#allocation7 + $0x4] sm:$0xf]
    %v152 = vld [vmem:[#allocation7 + $0x8] sm:$0xf]
    %v153 = vld [vmem:[#allocation7 + $0xc] sm:$0xf]
    %v154 = vld [vmem:[#allocation7 + $0x10] sm:$0xf]
    %v155 = vld [vmem:[#allocation7 + $0x14] sm:$0xf]
    %v156 = vld [vmem:[#allocation7 + $0x18] sm:$0xf]
    %v157 = vld [vmem:[#allocation7 + $0x1c] sm:$0xf]
    %v158 = vld [vmem:[#allocation7 + $0x20] sm:$0xf]
    %v159 = vld [vmem:[#allocation7 + $0x24] sm:$0xf]
    %v160 = vld [vmem:[#allocation7 + $0x28] sm:$0xf]
    %v161 = vld [vmem:[#allocation7 + $0x2c] sm:$0xf]
    %v162 = vld [vmem:[#allocation7 + $0x30] sm:$0xf]
    %v163 = vld [vmem:[#allocation7 + $0x34] sm:$0xf]
    %v164 = vld [vmem:[#allocation7 + $0x38] sm:$0xf]
    %v165 = vld [vmem:[#allocation7 + $0x3c] sm:$0xf]
    %v166 = vld [vmem:[%s4] sm:$0x1]
    %v168 = vperm.slane %v166, 0
    %v186 = vunpack.c.l.b16 %v150
    %v187 = vunpack.c.l.b16 %v151
    %v188 = vunpack.c.l.b16 %v152
    %v189 = vunpack.c.l.b16 %v153
    %v190 = vunpack.c.l.b16 %v154
    %v191 = vunpack.c.l.b16 %v155
    %v192 = vunpack.c.l.b16 %v156
    %v193 = vunpack.c.l.b16 %v157
    %v194 = vunpack.c.l.b16 %v158
    %v195 = vunpack.c.l.b16 %v159
    %v196 = vunpack.c.l.b16 %v160
    %v197 = vunpack.c.l.b16 %v161
    %v198 = vunpack.c.l.b16 %v162
    %v199 = vunpack.c.l.b16 %v163
    %v200 = vunpack.c.l.b16 %v164
    %v201 = vunpack.c.l.b16 %v165
    %v202 = vpack.c.b16 %v187, %v186
    %v203 = vpack.c.b16 %v189, %v188
    %v204 = vpack.c.b16 %v191, %v190
    %v205 = vpack.c.b16 %v193, %v192
    %v206 = vpack.c.b16 %v195, %v194
    %v207 = vpack.c.b16 %v197, %v196
    %v208 = vpack.c.b16 %v199, %v198
    %v209 = vpack.c.b16 %v201, %v200
    %218 = vmatpush.bf16.xpose.msra.mxu0 %v209
    %219 = vmatpush.bf16.xpose.msra.mxu0 %v208
    %220 = vmatpush.bf16.xpose.msra.mxu0 %v207
    %221 = vmatpush.bf16.xpose.msra.mxu0 %v206
    %222 = vmatpush.bf16.xpose.msra.mxu0 %v205
    %223 = vmatpush.bf16.xpose.msra.mxu0 %v204
    %224 = vmatpush.bf16.xpose.msra.mxu0 %v203
    %225 = vmatpush.bf16.xpose.msra.mxu0 %v202
    %226 = vmatmul.bf16.gmra.mxu0 %v149
    %v227 = vpop.f32.mrf.mxu0
    %v228 = vadd.f32 %v168, %v227
    %v229 = vpop.f32.mrf.mxu0
    %230 = vdwg.mxu0
    %231 = vmax.xlane.f32.xlu0 %v228
    %v232 = vpop.xlane.xlu0 %231
    %v233 = vsub.f32 %v228, %v232
    %v234 = vmul.f32 %v233, 1.442695
    %v235 = vpow.pop %v234
    %236 = vadd.xlane.f32.xlu0 %v235
    %v237 = vpop.xlane.xlu0 %236
    %v238 = vrcp.pop %v237
    %v239 = vmul.f32 %v237, %v238
    %v240 = vsub.f32 1.0, %v239
    %v241 = vmul.f32 %v238, %v240
    %v242 = vadd.f32 %v238, %v241
    %vm243 = vweird.f32 %v237
    %vm244 = vweird.f32 %v238
    %vm245 = vmor %vm243, %vm244
    %v246 = vsel %vm245, %v238, %v242
    %v247 = vand.u32 2147483647, %v237
    %vm248 = vcmp.eq.f32.partialorder %v247, 8.507059e+37
    %v249 = vand.u32 %v237, 2147483648
    %v250 = vor.u32 1.1754944e-38, %v249
    %v251 = vsel %vm248, %v250, %v246
    %v252 = vmul.f32 %v235, %v251
    %253 = vst [vmem:[#allocation8] sm:$0xff] %v252
    // Predicated region
    $region34: #{tpu_custom_call.1} parent=1 // pred_check
      _
    $region35: #{tpu_custom_call.1} parent=1 // pred_check_branch
      %255 = sbr.rel (0) target = $region37
    $region36: #{tpu_custom_call.1} parent=1 // pred_region
      %257 = vsyncadd [#allocation4], 0
      %s259 = sshll.u32 [#allocation8], 4
      %s260 = int_to_ptr.vmem [resolvable:$true] %s259
      %s261 = sshll.u32 %s5, 4
      %s262 = int_to_ptr.hbm [resolvable:$true] %s261
      %264 = dma.vmem_to_hbm [thread:$0]  %s260, 128, %s262, [#allocation4]
    $region37: #{tpu_custom_call.1} parent=1 // pred_fallthru
      _
    // Predicated region
    $region38: #{tpu_custom_call.1} parent=1 // pred_check
      _
    $region39: #{tpu_custom_call.1} parent=1 // pred_check_branch
      %266 = sbr.rel (0) target = $region41
    $region40: #{tpu_custom_call.1} parent=1 // pred_region
      %268 = dma.done [#allocation4], 128
    $region41: #{tpu_custom_call.1} parent=1 // pred_fallthru
      _
    %269 = vsyncpa [#allocation3], 1
    %270 = vsyncpa [#allocation6], 1
    %271 = vsyncpa [#allocation4], 1

// kernel: tpu_custom_call.1
$region0: #{tpu_custom_call.1}
  #allocation0 [shape = 'u32[]', space=smem, size = 0x4, offset = 0x4, fixed_abs, tag = 'smem constant byte address 0x4 - core index']
  #allocation1 [shape = 'u32[72,128]{1,0:T(1,128)}', space=vmem, size = 0x9000, scoped, tag = 'internal scratch']
  %s0 = inlined_call_operand.hbm [shape: bf16[8,128], index: 0, kind: input, shape index: {}]
  %s1 = inlined_call_operand.hbm [shape: bf16[128,128], index: 1, kind: input, shape index: {}]
  %s2 = inlined_call_operand.vmem [shape: f32[1,128], index: 2, kind: input, shape index: {}]
  %s3 = inlined_call_operand.hbm [shape: bf16[128,128], index: 3, kind: input, shape index: {}]
  %s4 = inlined_call_operand.vmem [shape: f32[1,128], index: 4, kind: input, shape index: {}]
  %s5 = inlined_call_operand.hbm [shape: f32[8,128], index: 5, kind: output, shape index: {}]
  %s6 = sld [smem:[#allocation0]]
  $region42: #{tpu_custom_call.1} parent=0
    _
  %s8 = ssub.s32 1, %s6
  %s9 = scalar_select 0, %s8, %s6
  $region1: #{tpu_custom_call.1} parent=0
    #allocation2 [shape = 'u8[2048]{0}', space=vmem, size = 0x800, scoped, tag = 'input window, operand 0, single buffered']
    #allocation3 [shape = 's32[1]{0}', space=sflag, size = 0x4, scoped, tag = 'scoped memory for tpu_custom_call.1']
    #allocation4 [shape = 's32[1]{0}', space=sflag, size = 0x4, scoped, tag = 'scoped memory for tpu_custom_call.1']
    #allocation5 [shape = 'u8[32768]{0}', space=vmem, size = 0x8000, scoped, tag = 'input window, operand 1, single buffered']
    #allocation6 [shape = 's32[1]{0}', space=sflag, size = 0x4, scoped, tag = 'scoped memory for tpu_custom_call.1']
    #allocation7 [shape = 'u8[32768]{0}', space=vmem, size = 0x8000, scoped, tag = 'input window, operand 3, single buffered']
    #allocation8 [shape = 'u8[4096]{0}', space=vmem, size = 0x1000, scoped, tag = 'output window, operand 0, single buffered']
    %10 = vsyncpa [#allocation3], 0
    %11 = vsyncpa [#allocation6], 0
    %12 = vsyncpa [#allocation4], 0
    // Predicated region
    $region2: #{tpu_custom_call.1} parent=1 // pred_check
      _
    $region3: #{tpu_custom_call.1} parent=1 // pred_check_branch
      %14 = sbr.rel (0) target = $region5
    $region4: #{tpu_custom_call.1} parent=1 // pred_region
      %16 = vsyncadd [#allocation3], 0
      %s18 = sshll.u32 %s0, 4
      %s19 = int_to_ptr.hbm [resolvable:$true] %s18
      %s20 = sshll.u32 [#allocation2], 4
      %s21 = int_to_ptr.vmem [resolvable:$true] %s20
      %23 = dma.hbm_to_vmem [thread:$0]  %s19, 64, %s21, [#allocation3]
    $region5: #{tpu_custom_call.1} parent=1 // pred_fallthru
      _
    // Predicated region
    $region6: #{tpu_custom_call.1} parent=1 // pred_check
      _
    $region7: #{tpu_custom_call.1} parent=1 // pred_check_branch
      %25 = sbr.rel (0) target = $region9
    $region8: #{tpu_custom_call.1} parent=1 // pred_region
      %27 = vsyncadd [#allocation6], 0
      %s28 = sshll.u32 %s1, 4
      %s29 = int_to_ptr.hbm [resolvable:$true] %s28
      %s30 = sshll.u32 [#allocation5], 4
      %s31 = int_to_ptr.vmem [resolvable:$true] %s30
      %36 = dma.hbm_to_vmem [thread:$0]  %s29, 1024, %s31, [#allocation6], 64, 64, 4
    $region9: #{tpu_custom_call.1} parent=1 // pred_fallthru
      _
    // Predicated region
    $region10: #{tpu_custom_call.1} parent=1 // pred_check
      _
    $region11: #{tpu_custom_call.1} parent=1 // pred_check_branch
      %38 = sbr.rel (0) target = $region13
    $region12: #{tpu_custom_call.1} parent=1 // pred_region
      _
    $region13: #{tpu_custom_call.1} parent=1 // pred_fallthru
      _
    // Predicated region
    $region14: #{tpu_custom_call.1} parent=1 // pred_check
      _
    $region15: #{tpu_custom_call.1} parent=1 // pred_check_branch
      %40 = sbr.rel (0) target = $region17
    $region16: #{tpu_custom_call.1} parent=1 // pred_region
      %42 = vsyncadd [#allocation6], 0
      %s43 = sshll.u32 %s3, 4
      %s44 = int_to_ptr.hbm [resolvable:$true] %s43
      %s45 = sshll.u32 [#allocation7], 4
      %s46 = int_to_ptr.vmem [resolvable:$true] %s45
      %51 = dma.hbm_to_vmem [thread:$0]  %s44, 1024, %s46, [#allocation6], 64, 64, 4
    $region17: #{tpu_custom_call.1} parent=1 // pred_fallthru
      _
    // Predicated region
    $region18: #{tpu_custom_call.1} parent=1 // pred_check
      _
    $region19: #{tpu_custom_call.1} parent=1 // pred_check_branch
      %53 = sbr.rel (0) target = $region21
    $region20: #{tpu_custom_call.1} parent=1 // pred_region
      _
    $region21: #{tpu_custom_call.1} parent=1 // pred_fallthru
      _
    // Predicated region
    $region22: #{tpu_custom_call.1} parent=1 // pred_check
      _
    $region23: #{tpu_custom_call.1} parent=1 // pred_check_branch
      %55 = sbr.rel (0) target = $region25
    $region24: #{tpu_custom_call.1} parent=1 // pred_region
      %57 = dma.done [#allocation3], 64
    $region25: #{tpu_custom_call.1} parent=1 // pred_fallthru
      _
    // Predicated region
    $region26: #{tpu_custom_call.1} parent=1 // pred_check
      _
    $region27: #{tpu_custom_call.1} parent=1 // pred_check_branch
      %59 = sbr.rel (0) target = $region29
    $region28: #{tpu_custom_call.1} parent=1 // pred_region
      %61 = dma.done [#allocation6], 1024
    $region29: #{tpu_custom_call.1} parent=1 // pred_fallthru
      _
    // Predicated region
    $region30: #{tpu_custom_call.1} parent=1 // pred_check
      _
    $region31: #{tpu_custom_call.1} parent=1 // pred_check_branch
      %63 = sbr.rel (0) target = $region33
    $region32: #{tpu_custom_call.1} parent=1 // pred_region
      %65 = dma.done [#allocation6], 1024
    $region33: #{tpu_custom_call.1} parent=1 // pred_fallthru
      _
    %v66 = vld [vmem:[#allocation2] sm:$0xf]
    %v67 = vld [vmem:[#allocation5] sm:$0xf]
    %v68 = vld [vmem:[#allocation5 + $0x4] sm:$0xf]
    %v69 = vld [vmem:[#allocation5 + $0x8] sm:$0xf]
    %v70 = vld [vmem:[#allocation5 + $0xc] sm:$0xf]
    %v71 = vld [vmem:[#allocation5 + $0x10] sm:$0xf]
    %v72 = vld [vmem:[#allocation5 + $0x14] sm:$0xf]
    %v73 = vld [vmem:[#allocation5 + $0x18] sm:$0xf]
    %v74 = vld [vmem:[#allocation5 + $0x1c] sm:$0xf]
    %v75 = vld [vmem:[#allocation5 + $0x20] sm:$0xf]
    %v76 = vld [vmem:[#allocation5 + $0x24] sm:$0xf]
    %v77 = vld [vmem:[#allocation5 + $0x28] sm:$0xf]
    %v78 = vld [vmem:[#allocation5 + $0x2c] sm:$0xf]
    %v79 = vld [vmem:[#allocation5 + $0x30] sm:$0xf]
    %v80 = vld [vmem:[#allocation5 + $0x34] sm:$0xf]
    %v81 = vld [vmem:[#allocation5 + $0x38] sm:$0xf]
    %v82 = vld [vmem:[#allocation5 + $0x3c] sm:$0xf]
    %v83 = vld [vmem:[%s2] sm:$0x1]
    %v85 = vperm.slane %v83, 0
    %v103 = vunpack.c.l.b16 %v67
    %v104 = vunpack.c.l.b16 %v68
    %v105 = vunpack.c.l.b16 %v69
    %v106 = vunpack.c.l.b16 %v70
    %v107 = vunpack.c.l.b16 %v71
    %v108 = vunpack.c.l.b16 %v72
    %v109 = vunpack.c.l.b16 %v73
    %v110 = vunpack.c.l.b16 %v74
    %v111 = vunpack.c.l.b16 %v75
    %v112 = vunpack.c.l.b16 %v76
    %v113 = vunpack.c.l.b16 %v77
    %v114 = vunpack.c.l.b16 %v78
    %v115 = vunpack.c.l.b16 %v79
    %v116 = vunpack.c.l.b16 %v80
    %v117 = vunpack.c.l.b16 %v81
    %v118 = vunpack.c.l.b16 %v82
    %v119 = vpack.c.b16 %v104, %v103
    %v120 = vpack.c.b16 %v106, %v105
    %v121 = vpack.c.b16 %v108, %v107
    %v122 = vpack.c.b16 %v110, %v109
    %v123 = vpack.c.b16 %v112, %v111
    %v124 = vpack.c.b16 %v114, %v113
    %v125 = vpack.c.b16 %v116, %v115
    %v126 = vpack.c.b16 %v118, %v117
    %135 = vmatpush.bf16.xpose.msra.mxu0 %v126
    %136 = vmatpush.bf16.xpose.msra.mxu0 %v125
    %137 = vmatpush.bf16.xpose.msra.mxu0 %v124
    %138 = vmatpush.bf16.xpose.msra.mxu0 %v123
    %139 = vmatpush.bf16.xpose.msra.mxu0 %v122
    %140 = vmatpush.bf16.xpose.msra.mxu0 %v121
    %141 = vmatpush.bf16.xpose.msra.mxu0 %v120
    %142 = vmatpush.bf16.xpose.msra.mxu0 %v119
    %143 = vmatmul.bf16.gmra.mxu0 %v66
    %v144 = vpop.f32.mrf.mxu0
    %v145 = vadd.f32 %v85, %v144
    %v146 = vpop.f32.mrf.mxu0
    %147 = vdwg.mxu0
    %v148 = vmax.f32 %v145, 0.0
    %v149 = vpack.c.bf16 %v148, %v148
    %v150 = vld [vmem:[#allocation7] sm:$0xf]
    %v151 = vld [vmem:[#allocation7 + $0x4] sm:$0xf]
    %v152 = vld [vmem:[#allocation7 + $0x8] sm:$0xf]
    %v153 = vld [vmem:[#allocation7 + $0xc] sm:$0xf]
    %v154 = vld [vmem:[#allocation7 + $0x10] sm:$0xf]
    %v155 = vld [vmem:[#allocation7 + $0x14] sm:$0xf]
    %v156 = vld [vmem:[#allocation7 + $0x18] sm:$0xf]
    %v157 = vld [vmem:[#allocation7 + $0x1c] sm:$0xf]
    %v158 = vld [vmem:[#allocation7 + $0x20] sm:$0xf]
    %v159 = vld [vmem:[#allocation7 + $0x24] sm:$0xf]
    %v160 = vld [vmem:[#allocation7 + $0x28] sm:$0xf]
    %v161 = vld [vmem:[#allocation7 + $0x2c] sm:$0xf]
    %v162 = vld [vmem:[#allocation7 + $0x30] sm:$0xf]
    %v163 = vld [vmem:[#allocation7 + $0x34] sm:$0xf]
    %v164 = vld [vmem:[#allocation7 + $0x38] sm:$0xf]
    %v165 = vld [vmem:[#allocation7 + $0x3c] sm:$0xf]
    %v166 = vld [vmem:[%s4] sm:$0x1]
    %v168 = vperm.slane %v166, 0
    %v186 = vunpack.c.l.b16 %v150
    %v187 = vunpack.c.l.b16 %v151
    %v188 = vunpack.c.l.b16 %v152
    %v189 = vunpack.c.l.b16 %v153
    %v190 = vunpack.c.l.b16 %v154
    %v191 = vunpack.c.l.b16 %v155
    %v192 = vunpack.c.l.b16 %v156
    %v193 = vunpack.c.l.b16 %v157
    %v194 = vunpack.c.l.b16 %v158
    %v195 = vunpack.c.l.b16 %v159
    %v196 = vunpack.c.l.b16 %v160
    %v197 = vunpack.c.l.b16 %v161
    %v198 = vunpack.c.l.b16 %v162
    %v199 = vunpack.c.l.b16 %v163
    %v200 = vunpack.c.l.b16 %v164
    %v201 = vunpack.c.l.b16 %v165
    %v202 = vpack.c.b16 %v187, %v186
    %v203 = vpack.c.b16 %v189, %v188
    %v204 = vpack.c.b16 %v191, %v190
    %v205 = vpack.c.b16 %v193, %v192
    %v206 = vpack.c.b16 %v195, %v194
    %v207 = vpack.c.b16 %v197, %v196
    %v208 = vpack.c.b16 %v199, %v198
    %v209 = vpack.c.b16 %v201, %v200
    %218 = vmatpush.bf16.xpose.msra.mxu0 %v209
    %219 = vmatpush.bf16.xpose.msra.mxu0 %v208
    %220 = vmatpush.bf16.xpose.msra.mxu0 %v207
    %221 = vmatpush.bf16.xpose.msra.mxu0 %v206
    %222 = vmatpush.bf16.xpose.msra.mxu0 %v205
    %223 = vmatpush.bf16.xpose.msra.mxu0 %v204
    %224 = vmatpush.bf16.xpose.msra.mxu0 %v203
    %225 = vmatpush.bf16.xpose.msra.mxu0 %v202
    %226 = vmatmul.bf16.gmra.mxu0 %v149
    %v227 = vpop.f32.mrf.mxu0
    %v228 = vadd.f32 %v168, %v227
    %v229 = vpop.f32.mrf.mxu0
    %230 = vdwg.mxu0
    %231 = vmax.xlane.f32.xlu0 %v228
    %v232 = vpop.xlane.xlu0 %231
    %v233 = vsub.f32 %v228, %v232
    %v234 = vmul.f32 %v233, 1.442695
    %v235 = vpow.pop %v234
    %236 = vadd.xlane.f32.xlu0 %v235
    %v237 = vpop.xlane.xlu0 %236
    %v238 = vrcp.pop %v237
    %v239 = vmul.f32 %v237, %v238
    %v240 = vsub.f32 1.0, %v239
    %v241 = vmul.f32 %v238, %v240
    %v242 = vadd.f32 %v238, %v241
    %vm243 = vweird.f32 %v237
    %vm244 = vweird.f32 %v238
    %vm245 = vmor %vm243, %vm244
    %v246 = vsel %vm245, %v238, %v242
    %v247 = vand.u32 2147483647, %v237
    %vm248 = vcmp.eq.f32.partialorder %v247, 8.507059e+37
    %v249 = vand.u32 %v237, 2147483648
    %v250 = vor.u32 1.1754944e-38, %v249
    %v251 = vsel %vm248, %v250, %v246
    %v252 = vmul.f32 %v235, %v251
    %253 = vst [vmem:[#allocation8] sm:$0xff] %v252
    // Predicated region
    $region34: #{tpu_custom_call.1} parent=1 // pred_check
      _
    $region35: #{tpu_custom_call.1} parent=1 // pred_check_branch
      %255 = sbr.rel (0) target = $region37
    $region36: #{tpu_custom_call.1} parent=1 // pred_region
      %257 = vsyncadd [#allocation4], 0
      %s259 = sshll.u32 [#allocation8], 4
      %s260 = int_to_ptr.vmem [resolvable:$true] %s259
      %s261 = sshll.u32 %s5, 4
      %s262 = int_to_ptr.hbm [resolvable:$true] %s261
      %264 = dma.vmem_to_hbm [thread:$0]  %s260, 128, %s262, [#allocation4]
    $region37: #{tpu_custom_call.1} parent=1 // pred_fallthru
      _
    // Predicated region
    $region38: #{tpu_custom_call.1} parent=1 // pred_check
      _
    $region39: #{tpu_custom_call.1} parent=1 // pred_check_branch
      %266 = sbr.rel (0) target = $region41
    $region40: #{tpu_custom_call.1} parent=1 // pred_region
      %268 = dma.done [#allocation4], 128
    $region41: #{tpu_custom_call.1} parent=1 // pred_fallthru
      _
    %269 = vsyncpa [#allocation3], 1
    %270 = vsyncpa [#allocation6], 1
    %271 = vsyncpa [#allocation4], 1

</llo_original>
